<compile_context>
chip_gen: v5e
topology: v5e:2x2
jax: 0.10.0
libtpu: 0.0.40
codegen_flags: <defaults>
</compile_context>

<pallas_src>
import jax
import jax.numpy as jnp
from jax.experimental import pallas as pl
from jax.experimental.pallas import tpu as pltpu


def _make_dice_partial_kernel(nb, block_rows, lanes, valid_rows_last, has_weights):
    """Build the per-block partial-reduction kernel.

    Each grid step reads one (block_rows, lanes) tile of pred/gt/mask (and
    optionally weights), reduces over the row (sublane) axis only, and writes
    [sum(p*g*m), sum(p*m), sum(g*m)] as a single (3, lanes) store into its
    private (1, 3, lanes) output slice.  Blocks are fully independent.
    """
    # Only the last block can be ragged; if it is exact, skip masking entirely.
    needs_row_mask = valid_rows_last != block_rows

    def kernel(*refs):
        if has_weights:
            pred_ref, gt_ref, mask_ref, w_ref, out_ref = refs
        else:
            pred_ref, gt_ref, mask_ref, out_ref = refs
            w_ref = None

        p = pred_ref[...].astype(jnp.float32)
        g = gt_ref[...].astype(jnp.float32)
        m = mask_ref[...].astype(jnp.float32)
        if has_weights:
            # Fold weights into the mask in-kernel (streamed read, hides
            # under the DMA) instead of materializing weights*mask in HBM.
            m = m * w_ref[...].astype(jnp.float32)

        if needs_row_mask:
            # The last grid block extends past the real `rows`; its trailing
            # rows contain undefined VMEM data.  Zero them so they contribute
            # nothing (zeroing p/g/m individually also kills any NaN garbage).
            # One compare + 3 selects per tile: negligible vs. the HBM DMA.
            row = jax.lax.broadcasted_iota(jnp.int32, (block_rows, lanes), 0)
            limit = jnp.where(pl.program_id(0) == nb - 1,
                              valid_rows_last, block_rows)
            keep = row < limit
            p = jnp.where(keep, p, 0.0)
            g = jnp.where(keep, g, 0.0)
            m = jnp.where(keep, m, 0.0)

        pm = p * m
        gm = g * m
        # Sublane-axis (row) reductions only; single coalesced (3, lanes) store.
        pgm_sum = jnp.sum(pm * g, axis=0, keepdims=True)   # (1, lanes)
        pm_sum = jnp.sum(pm, axis=0, keepdims=True)
        gm_sum = jnp.sum(gm, axis=0, keepdims=True)
        out_ref[0] = jnp.concatenate([pgm_sum, pm_sum, gm_sum], axis=0)

    return kernel


def dice_loss(pred, gt, mask, weights=None, eps=1e-6,
              lanes=512, block_rows=1024):
    """Pallas implementation of DiceLoss.forward. Returns a scalar float32."""
    if pred.ndim == 4:
        # TODO(synk): for C > 1 this strided slice materializes a copy of pred
        # and gt; selecting channel 0 via an index_map on the original layout
        # would avoid it.  For the common C == 1 case it is a free squeeze.
        pred = pred[:, 0, :, :]
        gt = gt[:, 0, :, :]
    assert pred.shape == gt.shape
    assert pred.shape == mask.shape
    if weights is not None:
        assert weights.shape == mask.shape

    total = pred.size                       # static Python int
    rows = pl.cdiv(total, lanes)
    lane_pad = rows * lanes - total

    def to_slab(x):
        # Keep native dtype (bf16 passes through; cast to f32 happens in-kernel).
        flat = x.reshape(-1)
        if lane_pad:
            # TODO(synk): this full-array pad copy only triggers when total is
            # not a multiple of `lanes`; a fused producer (allow_input_fusion)
            # or a separate 1-D tail pass could remove it.
            flat = jnp.pad(flat, (0, lane_pad))
        # total % lanes == 0 -> pure bitcast reshape, no HBM traffic.
        return flat.reshape(rows, lanes)

    inputs = [to_slab(pred), to_slab(gt), to_slab(mask)]
    has_weights = weights is not None
    if has_weights:
        inputs.append(to_slab(weights))

    # Block sizing: either one exact block covering all rows, or a
    # multiple-of-8-sublane block with the ragged last block masked in-kernel.
    if rows <= block_rows:
        block_rows = rows                   # single block, equals full dim
    else:
        block_rows = max(8, (block_rows // 8) * 8)   # keep (8,128) legality
    nb = pl.cdiv(rows, block_rows)
    valid_rows_last = rows - (nb - 1) * block_rows

    in_spec = pl.BlockSpec((block_rows, lanes), lambda i: (i, 0))
    out_spec = pl.BlockSpec((1, 3, lanes), lambda i: (i, 0, 0))

    kernel = _make_dice_partial_kernel(nb, block_rows, lanes,
                                       valid_rows_last, has_weights)

    partials = pl.pallas_call(
        kernel,
        out_shape=jax.ShapeDtypeStruct((nb, 3, lanes), jnp.float32),
        grid=(nb,),
        in_specs=[in_spec] * len(inputs),
        out_specs=out_spec,
        compiler_params=pltpu.CompilerParams(
            dimension_semantics=("parallel",),
            # 4 inputs x 2 buffers x 2 MiB (f32, 1024x512) ~= 16 MiB; raise the
            # scoped limit so v5e (16 MiB default) compiles and v6e/v7x get the
            # bigger tiles.  48 MiB stays under v7x's 64 MiB physical per TC.
            vmem_limit_bytes=48 * 1024 * 1024),
    )(*inputs)

    # Tiny combine + finalize in JAX (a few KB of partials).
    sums = jnp.sum(partials, axis=(0, 2))   # [sum(pgm), sum(pm), sum(gm)]
    intersection = sums[0]
    union = sums[1] + sums[2] + eps
    return (1.0 - 2.0 * intersection / union).astype(jnp.float32)


def _reference_dice_loss(pred, gt, mask, weights=None, eps=1e-6):
    if pred.ndim == 4:
        pred = pred[:, 0, :, :]
        gt = gt[:, 0, :, :]
    if weights is not None:
        mask = weights * mask
    intersection = jnp.sum(pred * gt * mask)
    union = jnp.sum(pred * mask) + jnp.sum(gt * mask) + eps
    return 1.0 - 2.0 * intersection / union


if __name__ == "__main__":
    key = jax.random.PRNGKey(0)

    def check(loss, ref, tag, atol=1e-4):
        assert loss <= 1.0, f"{tag}: dice loss must be <= 1"
        assert jnp.allclose(loss, ref, atol=atol, rtol=atol), (tag, loss, ref)

    # Case 1: NCHW with C=4 (channel-0 select) + weights, exact lane multiple.
    k1, k2, k3, k4 = jax.random.split(key, 4)
    B, C, H, W = 2, 4, 16, 16
    pred = jax.nn.sigmoid(jax.random.normal(k1, (B, C, H, W), jnp.float32))
    gt = (jax.random.uniform(k2, (B, C, H, W)) > 0.5).astype(jnp.float32)
    mask = (jax.random.uniform(k3, (B, H, W)) > 0.2).astype(jnp.float32)
    weights = jax.random.uniform(k4, (B, H, W), jnp.float32)
    loss = jax.block_until_ready(dice_loss(pred, gt, mask, weights))
    check(loss, _reference_dice_loss(pred, gt, mask, weights), "case1", 1e-5)

    # Case 2: no weights, small block_rows -> multi-block "parallel" grid.
    kk = jax.random.split(key, 3)
    B2, H2, W2 = 3, 64, 128
    pred_l = jax.nn.sigmoid(jax.random.normal(kk[0], (B2, 1, H2, W2), jnp.float32))
    gt_l = (jax.random.uniform(kk[1], (B2, 1, H2, W2)) > 0.5).astype(jnp.float32)
    mask_l = (jax.random.uniform(kk[2], (B2, H2, W2)) > 0.2).astype(jnp.float32)
    loss_l = jax.block_until_ready(dice_loss(pred_l, gt_l, mask_l, block_rows=16))
    check(loss_l, _reference_dice_loss(pred_l, gt_l, mask_l), "case2")

    # Case 3: ragged rows (rows % block_rows != 0) -> in-kernel tail masking.
    kr = jax.random.split(key, 3)
    B3, H3, W3 = 2, 40, 64           # total = 5120 -> rows = 10, block_rows = 8
    pred_r = jax.nn.sigmoid(jax.random.normal(kr[0], (B3, H3, W3), jnp.float32))
    gt_r = (jax.random.uniform(kr[1], (B3, H3, W3)) > 0.5).astype(jnp.float32)
    mask_r = (jax.random.uniform(kr[2], (B3, H3, W3)) > 0.2).astype(jnp.float32)
    loss_r = jax.block_until_ready(dice_loss(pred_r, gt_r, mask_r, block_rows=8))
    check(loss_r, _reference_dice_loss(pred_r, gt_r, mask_r), "case3")

    # Case 4: total not a multiple of lanes (lane-tail pad path) + weights.
    kt = jax.random.split(key, 4)
    B4, H4, W4 = 2, 15, 17           # total = 510
    pred_t = jax.nn.sigmoid(jax.random.normal(kt[0], (B4, H4, W4), jnp.float32))
    gt_t = (jax.random.uniform(kt[1], (B4, H4, W4)) > 0.5).astype(jnp.float32)
    mask_t = (jax.random.uniform(kt[2], (B4, H4, W4)) > 0.2).astype(jnp.float32)
    w_t = jax.random.uniform(kt[3], (B4, H4, W4), jnp.float32)
    loss_t = jax.block_until_ready(dice_loss(pred_t, gt_t, mask_t, w_t))
    check(loss_t, _reference_dice_loss(pred_t, gt_t, mask_t, w_t), "case4")

    print("KERNEL_OK")
</pallas_src>

<mosaic_0001>
module attributes {stable_mosaic.version = 11 : i64} {
  func.func @kernel(%arg0: i32, %arg1: memref<1x512xf32, #tpu.memory_space<vmem>>, %arg2: memref<1x512xf32, #tpu.memory_space<vmem>>, %arg3: memref<1x512xf32, #tpu.memory_space<vmem>>, %arg4: memref<1x512xf32, #tpu.memory_space<vmem>>, %arg5: memref<1x3x512xf32, #tpu.memory_space<vmem>>) attributes {dimension_semantics = [#tpu.dimension_semantics<parallel>], iteration_bounds = array<i64: 1>, scalar_prefetch = 0 : i64, scratch_operands = 0 : i64, tpu.core_type = #tpu.core_type<tc>, window_params = [{transform_indices = @transform_0, window_bounds = array<i64: 1, 512>}, {transform_indices = @transform_1, window_bounds = array<i64: 1, 512>}, {transform_indices = @transform_2, window_bounds = array<i64: 1, 512>}, {transform_indices = @transform_3, window_bounds = array<i64: 1, 512>}, {transform_indices = @transform_4, window_bounds = array<i64: 1, 3, 512>}]} {
    %c0 = arith.constant 0 : index
    %c0_0 = arith.constant 0 : index
    %0 = vector.load %arg1[%c0, %c0_0] : memref<1x512xf32, #tpu.memory_space<vmem>>, vector<1x512xf32>
    %c0_1 = arith.constant 0 : index
    %c0_2 = arith.constant 0 : index
    %1 = vector.load %arg2[%c0_1, %c0_2] : memref<1x512xf32, #tpu.memory_space<vmem>>, vector<1x512xf32>
    %c0_3 = arith.constant 0 : index
    %c0_4 = arith.constant 0 : index
    %2 = vector.load %arg3[%c0_3, %c0_4] : memref<1x512xf32, #tpu.memory_space<vmem>>, vector<1x512xf32>
    %c0_5 = arith.constant 0 : index
    %c0_6 = arith.constant 0 : index
    %3 = vector.load %arg4[%c0_5, %c0_6] : memref<1x512xf32, #tpu.memory_space<vmem>>, vector<1x512xf32>
    %4 = arith.mulf %2, %3 : vector<1x512xf32>
    %5 = arith.mulf %0, %4 : vector<1x512xf32>
    %6 = arith.mulf %1, %4 : vector<1x512xf32>
    %7 = arith.mulf %5, %1 : vector<1x512xf32>
    %cst = arith.constant dense<0.000000e+00> : vector<512xf32>
    %8 = vector.multi_reduction <add>, %7, %cst [0] : vector<1x512xf32> to vector<512xf32>
    %9 = vector.shape_cast %8 : vector<512xf32> to vector<1x512xf32>
    %cst_7 = arith.constant dense<0.000000e+00> : vector<512xf32>
    %10 = vector.multi_reduction <add>, %5, %cst_7 [0] : vector<1x512xf32> to vector<512xf32>
    %11 = vector.shape_cast %10 : vector<512xf32> to vector<1x512xf32>
    %cst_8 = arith.constant dense<0.000000e+00> : vector<512xf32>
    %12 = vector.multi_reduction <add>, %6, %cst_8 [0] : vector<1x512xf32> to vector<512xf32>
    %13 = vector.shape_cast %12 : vector<512xf32> to vector<1x512xf32>
    %14 = tpu.concatenate %9, %11, %13 in 0 : vector<1x512xf32>, vector<1x512xf32>, vector<1x512xf32> -> vector<3x512xf32>
    %c0_9 = arith.constant 0 : index
    %c0_10 = arith.constant 0 : index
    %c0_11 = arith.constant 0 : index
    %15 = vector.load %arg5[%c0_9, %c0_10, %c0_11] : memref<1x3x512xf32, #tpu.memory_space<vmem>>, vector<1x3x512xf32>
    %16 = vector.shape_cast %15 : vector<1x3x512xf32> to vector<3x512xf32>
    %17 = vector.shape_cast %14 : vector<3x512xf32> to vector<1x3x512xf32>
    tpu.vector_store %arg5[%c0_9, %c0_10, %c0_11], %17 {strides = array<i32>} : memref<1x3x512xf32, #tpu.memory_space<vmem>>, vector<1x3x512xf32>,
    return
  }
  func.func @transform_0(%arg0: i32) -> (i32, i32) {
    %c0_i32 = arith.constant 0 : i32
    %c0_i32_0 = arith.constant 0 : i32
    return %arg0, %c0_i32 : i32, i32
  }
  func.func @transform_1(%arg0: i32) -> (i32, i32) {
    %c0_i32 = arith.constant 0 : i32
    %c0_i32_0 = arith.constant 0 : i32
    return %arg0, %c0_i32 : i32, i32
  }
  func.func @transform_2(%arg0: i32) -> (i32, i32) {
    %c0_i32 = arith.constant 0 : i32
    %c0_i32_0 = arith.constant 0 : i32
    return %arg0, %c0_i32 : i32, i32
  }
  func.func @transform_3(%arg0: i32) -> (i32, i32) {
    %c0_i32 = arith.constant 0 : i32
    %c0_i32_0 = arith.constant 0 : i32
    return %arg0, %c0_i32 : i32, i32
  }
  func.func @transform_4(%arg0: i32) -> (i32, i32, i32) {
    %c0_i32 = arith.constant 0 : i32
    %c0_i32_0 = arith.constant 0 : i32
    %c0_i32_1 = arith.constant 0 : i32
    return %arg0, %c0_i32, %c0_i32_0 : i32, i32, i32
  }
}

</mosaic_0001>

<llo_original>
// kernel: tpu_custom_call.1
$region0: #{tpu_custom_call.1}
  #allocation0 [shape = 'u32[]', space=smem, size = 0x4, offset = 0x4, fixed_abs, tag = 'smem constant byte address 0x4 - core index']
  #allocation1 [shape = 'u32[72,128]{1,0:T(1,128)}', space=vmem, size = 0x9000, scoped, tag = 'internal scratch']
  %s0 = inlined_call_operand.hbm [shape: f32[1,512], index: 0, kind: input, shape index: {}]
  %s1 = inlined_call_operand.hbm [shape: f32[1,512], index: 1, kind: input, shape index: {}]
  %s2 = inlined_call_operand.hbm [shape: f32[1,512], index: 2, kind: input, shape index: {}]
  %s3 = inlined_call_operand.hbm [shape: f32[1,512], index: 3, kind: input, shape index: {}]
  %s4 = inlined_call_operand.vmem [shape: f32[1,3,512], index: 4, kind: output, shape index: {}]
  %s5 = sld [smem:[#allocation0]]
  $region42: #{tpu_custom_call.1} parent=0
    _
  %s7 = ssub.s32 1, %s5
  %s8 = scalar_select 0, %s7, %s5
  $region1: #{tpu_custom_call.1} parent=0
    #allocation2 [shape = 'u8[2048]{0}', space=vmem, size = 0x800, scoped, tag = 'input window, operand 0, single buffered']
    #allocation3 [shape = 's32[1]{0}', space=sflag, size = 0x4, scoped, tag = 'scoped memory for tpu_custom_call.1']
    #allocation4 [shape = 'u8[2048]{0}', space=vmem, size = 0x800, scoped, tag = 'input window, operand 1, single buffered']
    #allocation5 [shape = 's32[1]{0}', space=sflag, size = 0x4, scoped, tag = 'scoped memory for tpu_custom_call.1']
    #allocation6 [shape = 'u8[2048]{0}', space=vmem, size = 0x800, scoped, tag = 'input window, operand 2, single buffered']
    #allocation7 [shape = 'u8[2048]{0}', space=vmem, size = 0x800, scoped, tag = 'input window, operand 3, single buffered']
    #allocation8 [shape = 's32[1]{0}', space=sflag, size = 0x4, scoped, tag = 'scoped memory for tpu_custom_call.1']
    %9 = vsyncpa [#allocation3], 0
    %10 = vsyncpa [#allocation5], 0
    %11 = vsyncpa [#allocation8], 0
    // Predicated region
    $region2: #{tpu_custom_call.1} parent=1 // pred_check
      _
    $region3: #{tpu_custom_call.1} parent=1 // pred_check_branch
      %13 = sbr.rel (0) target = $region5
    $region4: #{tpu_custom_call.1} parent=1 // pred_region
      %15 = vsyncadd [#allocation3], 0
      %s17 = sshll.u32 %s0, 4
      %s18 = int_to_ptr.hbm [resolvable:$true] %s17
      %s19 = sshll.u32 [#allocation2], 4
      %s20 = int_to_ptr.vmem [resolvable:$true] %s19
      %22 = dma.hbm_to_vmem [thread:$0]  %s18, 64, %s20, [#allocation3]
    $region5: #{tpu_custom_call.1} parent=1 // pred_fallthru
      _
    // Predicated region
    $region6: #{tpu_custom_call.1} parent=1 // pred_check
      _
    $region7: #{tpu_custom_call.1} parent=1 // pred_check_branch
      %24 = sbr.rel (0) target = $region9
    $region8: #{tpu_custom_call.1} parent=1 // pred_region
      %26 = vsyncadd [#allocation5], 0
      %s28 = sshll.u32 %s1, 4
      %s29 = int_to_ptr.hbm [resolvable:$true] %s28
      %s30 = sshll.u32 [#allocation4], 4
      %s31 = int_to_ptr.vmem [resolvable:$true] %s30
      %33 = dma.hbm_to_vmem [thread:$0]  %s29, 64, %s31, [#allocation5]
    $region9: #{tpu_custom_call.1} parent=1 // pred_fallthru
      _
    // Predicated region
    $region10: #{tpu_custom_call.1} parent=1 // pred_check
      _
    $region11: #{tpu_custom_call.1} parent=1 // pred_check_branch
      %35 = sbr.rel (0) target = $region13
    $region12: #{tpu_custom_call.1} parent=1 // pred_region
      %37 = vsyncadd [#allocation5], 0
      %s39 = sshll.u32 %s2, 4
      %s40 = int_to_ptr.hbm [resolvable:$true] %s39
      %s41 = sshll.u32 [#allocation6], 4
      %s42 = int_to_ptr.vmem [resolvable:$true] %s41
      %44 = dma.hbm_to_vmem [thread:$0]  %s40, 64, %s42, [#allocation5]
    $region13: #{tpu_custom_call.1} parent=1 // pred_fallthru
      _
    // Predicated region
    $region14: #{tpu_custom_call.1} parent=1 // pred_check
      _
    $region15: #{tpu_custom_call.1} parent=1 // pred_check_branch
      %46 = sbr.rel (0) target = $region17
    $region16: #{tpu_custom_call.1} parent=1 // pred_region
      %48 = vsyncadd [#allocation8], 0
      %s50 = sshll.u32 %s3, 4
      %s51 = int_to_ptr.hbm [resolvable:$true] %s50
      %s52 = sshll.u32 [#allocation7], 4
      %s53 = int_to_ptr.vmem [resolvable:$true] %s52
      %55 = dma.hbm_to_vmem [thread:$0]  %s51, 64, %s53, [#allocation8]
    $region17: #{tpu_custom_call.1} parent=1 // pred_fallthru
      _
    // Predicated region
    $region18: #{tpu_custom_call.1} parent=1 // pred_check
      _
    $region19: #{tpu_custom_call.1} parent=1 // pred_check_branch
      %57 = sbr.rel (0) target = $region21
    $region20: #{tpu_custom_call.1} parent=1 // pred_region
      %59 = dma.done [#allocation3], 64
    $region21: #{tpu_custom_call.1} parent=1 // pred_fallthru
      _
    // Predicated region
    $region22: #{tpu_custom_call.1} parent=1 // pred_check
      _
    $region23: #{tpu_custom_call.1} parent=1 // pred_check_branch
      %61 = sbr.rel (0) target = $region25
    $region24: #{tpu_custom_call.1} parent=1 // pred_region
      %63 = dma.done [#allocation5], 64
    $region25: #{tpu_custom_call.1} parent=1 // pred_fallthru
      _
    // Predicated region
    $region26: #{tpu_custom_call.1} parent=1 // pred_check
      _
    $region27: #{tpu_custom_call.1} parent=1 // pred_check_branch
      %65 = sbr.rel (0) target = $region29
    $region28: #{tpu_custom_call.1} parent=1 // pred_region
      %67 = dma.done [#allocation5], 64
    $region29: #{tpu_custom_call.1} parent=1 // pred_fallthru
      _
    // Predicated region
    $region30: #{tpu_custom_call.1} parent=1 // pred_check
      _
    $region31: #{tpu_custom_call.1} parent=1 // pred_check_branch
      %69 = sbr.rel (0) target = $region33
    $region32: #{tpu_custom_call.1} parent=1 // pred_region
      %71 = dma.done [#allocation8], 64
    $region33: #{tpu_custom_call.1} parent=1 // pred_fallthru
      _
    %v72 = vld [vmem:[#allocation2] sm:$0xf]
    %v73 = vld [vmem:[#allocation4] sm:$0xf]
    %v74 = vld [vmem:[#allocation6] sm:$0xf]
    %v75 = vld [vmem:[#allocation7] sm:$0xf]
    %v76 = vmul.f32 %v74, %v75
    %v77 = vmul.f32 %v72, %v76
    %v78 = vmul.f32 %v73, %v76
    %v79 = vmul.f32 %v77, %v73
    %v80 = vadd.f32 %v79, 0.0
    %v81 = vadd.f32 %v77, 0.0
    %v82 = vadd.f32 %v78, 0.0
    %v84 = vperm.slane %v80, 0
    %v85 = vperm.slane %v80, 1
    %v86 = vperm.slane %v80, 2
    %v87 = vperm.slane %v80, 3
    %v93 = vperm.slane %v81, 0
    %v94 = vperm.slane %v81, 1
    %v95 = vperm.slane %v81, 2
    %v96 = vperm.slane %v81, 3
    %v102 = vperm.slane %v82, 0
    %v103 = vperm.slane %v82, 1
    %v104 = vperm.slane %v82, 2
    %v105 = vperm.slane %v82, 3
    %vm110 = vcmask 1040384
    %v111 = vsel %vm110, %v84, %v93
    %v112 = vsel %vm110, %v85, %v94
    %v113 = vsel %vm110, %v86, %v95
    %v114 = vsel %vm110, %v87, %v96
    %vm115 = vcmask 1041408
    %v116 = vsel %vm115, %v111, %v102
    %v117 = vsel %vm115, %v112, %v103
    %v118 = vsel %vm115, %v113, %v104
    %v119 = vsel %vm115, %v114, %v105
    %v124 = vrot.slane %v117, 4
    %v125 = vrot.slane %v119, 4
    %vm126 = vcmask 1043456
    %v127 = vsel %vm126, %v116, %v124
    %v128 = vsel %vm126, %v118, %v125
    %131 = vst [vmem:[%s4] sm:$0x77] %v127
    %132 = vst [vmem:[%s4 + $0x8] sm:$0x77] %v128
    // Predicated region
    $region34: #{tpu_custom_call.1} parent=1 // pred_check
      _
    $region35: #{tpu_custom_call.1} parent=1 // pred_check_branch
      %134 = sbr.rel (0) target = $region37
    $region36: #{tpu_custom_call.1} parent=1 // pred_region
      _
    $region37: #{tpu_custom_call.1} parent=1 // pred_fallthru
      _
    // Predicated region
    $region38: #{tpu_custom_call.1} parent=1 // pred_check
      _
    $region39: #{tpu_custom_call.1} parent=1 // pred_check_branch
      %136 = sbr.rel (0) target = $region41
    $region40: #{tpu_custom_call.1} parent=1 // pred_region
      _
    $region41: #{tpu_custom_call.1} parent=1 // pred_fallthru
      _
    %137 = vsyncpa [#allocation3], 1
    %138 = vsyncpa [#allocation5], 1
    %139 = vsyncpa [#allocation8], 1

</llo_original>
